<compile_context>
chip_gen: v5e
topology: v5e:2x2
jax: 0.10.0
libtpu: 0.0.40
codegen_flags: <defaults>
</compile_context>

<pallas_src>
import math

import jax
import jax.numpy as jnp
from jax.experimental import pallas as pl
from jax.experimental.pallas import tpu as pltpu

IN_DIM = 4
HID_DIM = 128
N_ACTIONS = 2
OUT_DIM = N_ACTIONS + 1      # fused output rows: [p(a0), p(a1), state_value]
AUG_DIM = 8                  # x^T rows + ones row + zero pad to a sublane tile


def _policy_kernel(x_ref, w1b1_ref, wh_ref, bh_ref, out_ref):
    # Feature-major: every tensor is (features, batch) so loads, MXU results
    # and stores are lane-dense along the batch axis.
    x = x_ref[...]                               # (8, tb): x^T | ones | zeros
    w1b1 = w1b1_ref[...]                         # (128, 8): W1^T | b1 | zeros

    # ---- affine1 + relu on the MXU (K=8, zero-padded => exact) ----
    h = jnp.dot(w1b1, x, preferred_element_type=jnp.float32)     # (128, tb)
    h = jnp.maximum(h, 0.0)

    # ---- fused action/value heads: (3, 128) @ (128, tb) ----
    hv = jnp.dot(wh_ref[...], h, preferred_element_type=jnp.float32)
    hv = hv + bh_ref[...]                        # (3, tb) + (3, 1) lane bcast

    # ---- elementwise 2-row softmax; value row passes through untouched ----
    l0 = hv[0:1, :]
    l1 = hv[1:2, :]
    m = jnp.maximum(l0, l1)
    e0 = jnp.exp(l0 - m)
    e1 = jnp.exp(l1 - m)
    inv = pl.reciprocal(e0 + e1, approx=False)   # exact: keeps 1e-5 tolerance
    out_ref[0:1, :] = e0 * inv
    out_ref[1:2, :] = e1 * inv
    out_ref[2:3, :] = hv[2:3, :]


def pack_params(raw_params):
    """Pack the 6 PyTorch-layout params into 3 feature-major kernel operands."""
    w1, b1, w2, b2, w3, b3 = raw_params
    pad = jnp.zeros((AUG_DIM - IN_DIM - 1, HID_DIM), jnp.float32)
    w1b1_t = jnp.concatenate([w1, b1, pad], axis=0).T            # (128, 8)
    wh_t = jnp.concatenate([w2, w3], axis=1).T                   # (3, 128)
    bh = jnp.concatenate([b2, b3], axis=1).T                     # (3, 1)
    return w1b1_t, wh_t, bh


def _choose_tile(B, block_b):
    # Tiny batches: a single full-extent block (the only legal sub-128 tile).
    if B <= 256:
        return B
    # Larger batches: 128-aligned tiles, at least 2 grid steps so "parallel"
    # can shard across v7x's two TensorCores, capped for pipelining.
    tb = 128 * math.ceil(B / (2 * 128))
    return min(block_b, tb)


def policy_forward(x, packed_params, *, block_b=4096):
    """x: (B, 4) float32. Returns (action_prob (B, 2), state_value (B, 1))."""
    w1b1_t, wh_t, bh = packed_params
    B = x.shape[0]

    # Feature-major input with a ones row (folds b1) and zero pad to 8 rows.
    x_aug_t = jnp.concatenate(
        [x.T,
         jnp.ones((1, B), jnp.float32),
         jnp.zeros((AUG_DIM - IN_DIM - 1, B), jnp.float32)], axis=0)  # (8, B)

    tb = _choose_tile(B, block_b)
    grid = (pl.cdiv(B, tb),)

    fused_t = pl.pallas_call(
        _policy_kernel,
        out_shape=jax.ShapeDtypeStruct((OUT_DIM, B), jnp.float32),
        grid=grid,
        in_specs=[
            pl.BlockSpec((AUG_DIM, tb), lambda i: (0, i)),
            pl.BlockSpec((HID_DIM, AUG_DIM), lambda i: (0, 0)),
            pl.BlockSpec((OUT_DIM, HID_DIM), lambda i: (0, 0)),
            pl.BlockSpec((OUT_DIM, 1), lambda i: (0, 0)),
        ],
        out_specs=pl.BlockSpec((OUT_DIM, tb), lambda i: (0, i)),
        compiler_params=pltpu.CompilerParams(
            dimension_semantics=("parallel",)),
    )(x_aug_t, w1b1_t, wh_t, bh)

    fused = fused_t.T                                            # (B, 3)
    return fused[:, :N_ACTIONS], fused[:, N_ACTIONS:]


def init_params(key):
    """Deterministic synthetic parameters (shapes match the nn.Linear layers)."""
    ks = jax.random.split(key, 6)
    # Stored as (in, out); biases kept 2-D (1, out) for clean packing.
    w1 = jax.random.uniform(ks[0], (IN_DIM, HID_DIM), jnp.float32, -0.5, 0.5)
    b1 = jax.random.uniform(ks[1], (1, HID_DIM), jnp.float32, -0.5, 0.5)
    w2 = jax.random.uniform(ks[2], (HID_DIM, N_ACTIONS), jnp.float32, -0.1, 0.1)
    b2 = jax.random.uniform(ks[3], (1, N_ACTIONS), jnp.float32, -0.1, 0.1)
    w3 = jax.random.uniform(ks[4], (HID_DIM, 1), jnp.float32, -0.1, 0.1)
    b3 = jax.random.uniform(ks[5], (1, 1), jnp.float32, -0.1, 0.1)
    return (w1, b1, w2, b2, w3, b3)


def _reference_forward(x, raw_params):
    """Plain-JAX reference for correctness check (full-precision matmuls)."""
    w1, b1, w2, b2, w3, b3 = raw_params
    hp = jax.lax.Precision.HIGHEST
    h = jnp.maximum(jnp.dot(x, w1, precision=hp) + b1, 0.0)
    ap = jax.nn.softmax(jnp.dot(h, w2, precision=hp) + b2, axis=-1)
    v = jnp.dot(h, w3, precision=hp) + b3
    return ap, v


# TODO(synk): saved_actions / rewards buffers and Categorical sampling belong
# to the training loop, not the forward pass; not implemented in the kernel.

if __name__ == "__main__":
    key = jax.random.PRNGKey(0)
    k_x, k_p = jax.random.split(key)
    raw_params = init_params(k_p)
    packed = pack_params(raw_params)

    # B=8: tiny single-block path.  B=300: multi-block grid with a partial
    # last tile (exercises the masked-writeback edge case from the review).
    for B in (8, 300):
        x = jax.random.normal(jax.random.fold_in(k_x, B), (B, IN_DIM),
                              jnp.float32)
        action_prob, state_value = policy_forward(x, packed)
        action_prob = jax.block_until_ready(action_prob)
        state_value = jax.block_until_ready(state_value)

        ap_ref, v_ref = _reference_forward(x, raw_params)
        assert action_prob.shape == (B, N_ACTIONS)
        assert state_value.shape == (B, 1)
        assert jnp.allclose(action_prob, ap_ref, atol=1e-5, rtol=1e-5)
        assert jnp.allclose(state_value, v_ref, atol=1e-5, rtol=1e-5)
        assert jnp.allclose(jnp.sum(action_prob, axis=-1), 1.0, atol=1e-5)

    print("KERNEL_OK")
</pallas_src>

<mosaic_0001>
module attributes {stable_mosaic.version = 11 : i64} {
  func.func @_policy_kernel(%arg0: i32, %arg1: memref<8x8xf32, #tpu.memory_space<vmem>>, %arg2: memref<128x8xf32, #tpu.memory_space<vmem>>, %arg3: memref<3x128xf32, #tpu.memory_space<vmem>>, %arg4: memref<3x1xf32, #tpu.memory_space<vmem>>, %arg5: memref<3x8xf32, #tpu.memory_space<vmem>>) attributes {dimension_semantics = [#tpu.dimension_semantics<parallel>], iteration_bounds = array<i64: 1>, scalar_prefetch = 0 : i64, scratch_operands = 0 : i64, tpu.core_type = #tpu.core_type<tc>, window_params = [{transform_indices = @transform_0, window_bounds = array<i64: 8, 8>}, {pipeline_mode = #tpu.pipeline_mode<synchronous>, transform_indices = @transform_1, window_bounds = array<i64: 128, 8>}, {pipeline_mode = #tpu.pipeline_mode<synchronous>, transform_indices = @transform_2, window_bounds = array<i64: 3, 128>}, {pipeline_mode = #tpu.pipeline_mode<synchronous>, transform_indices = @transform_3, window_bounds = array<i64: 3, 1>}, {transform_indices = @transform_4, window_bounds = array<i64: 3, 8>}]} {
    %c0 = arith.constant 0 : index
    %c0_0 = arith.constant 0 : index
    %0 = vector.load %arg1[%c0, %c0_0] : memref<8x8xf32, #tpu.memory_space<vmem>>, vector<8x8xf32>
    %c0_1 = arith.constant 0 : index
    %c0_2 = arith.constant 0 : index
    %1 = vector.load %arg2[%c0_1, %c0_2] : memref<128x8xf32, #tpu.memory_space<vmem>>, vector<128x8xf32>
    %cst = arith.constant dense<0.000000e+00> : vector<128x8xf32>
    %2 = tpu.matmul %1, %0, %cst {dimension_numbers = #tpu.dot_dimension_numbers<[1], [0], [0], [1], [0, 0, 1, 1], [], []>} : vector<128x8xf32>, vector<8x8xf32>, vector<128x8xf32> -> vector<128x8xf32>
    %cst_3 = arith.constant 0.000000e+00 : f32
    %3 = vector.broadcast %cst_3 : f32 to vector<128x8xf32>
    %4 = arith.maximumf %2, %3 : vector<128x8xf32>
    %c0_4 = arith.constant 0 : index
    %c0_5 = arith.constant 0 : index
    %5 = vector.load %arg3[%c0_4, %c0_5] : memref<3x128xf32, #tpu.memory_space<vmem>>, vector<3x128xf32>
    %cst_6 = arith.constant dense<0.000000e+00> : vector<3x8xf32>
    %6 = tpu.matmul %5, %4, %cst_6 {dimension_numbers = #tpu.dot_dimension_numbers<[1], [0], [0], [1], [0, 0, 1, 1], [], []>} : vector<3x128xf32>, vector<128x8xf32>, vector<3x8xf32> -> vector<3x8xf32>
    %c0_7 = arith.constant 0 : index
    %c0_8 = arith.constant 0 : index
    %7 = vector.load %arg4[%c0_7, %c0_8] : memref<3x1xf32, #tpu.memory_space<vmem>>, vector<3x1xf32>
    %8 = vector.broadcast %7 : vector<3x1xf32> to vector<3x8xf32>
    %9 = arith.addf %6, %8 : vector<3x8xf32>
    %10 = vector.extract_strided_slice %9 {offsets = [0, 0], sizes = [1, 8], strides = [1, 1]} : vector<3x8xf32> to vector<1x8xf32>
    %11 = vector.extract_strided_slice %9 {offsets = [1, 0], sizes = [1, 8], strides = [1, 1]} : vector<3x8xf32> to vector<1x8xf32>
    %12 = arith.maximumf %10, %11 : vector<1x8xf32>
    %13 = arith.subf %10, %12 : vector<1x8xf32>
    %14 = math.exp %13 : vector<1x8xf32>
    %15 = arith.subf %11, %12 : vector<1x8xf32>
    %16 = math.exp %15 : vector<1x8xf32>
    %17 = arith.addf %14, %16 : vector<1x8xf32>
    %18 = tpu.reciprocal %17 : vector<1x8xf32> -> vector<1x8xf32>
    %19 = arith.mulf %14, %18 : vector<1x8xf32>
    %c0_9 = arith.constant 0 : index
    %c0_10 = arith.constant 0 : index
    %20 = vector.load %arg5[%c0_9, %c0_10] : memref<3x8xf32, #tpu.memory_space<vmem>>, vector<1x8xf32>
    tpu.vector_store %arg5[%c0_9, %c0_10], %19 {strides = array<i32>} : memref<3x8xf32, #tpu.memory_space<vmem>>, vector<1x8xf32>,
    %21 = arith.mulf %16, %18 : vector<1x8xf32>
    %c1 = arith.constant 1 : index
    %c0_11 = arith.constant 0 : index
    %22 = vector.load %arg5[%c1, %c0_11] : memref<3x8xf32, #tpu.memory_space<vmem>>, vector<1x8xf32>
    tpu.vector_store %arg5[%c1, %c0_11], %21 {strides = array<i32>} : memref<3x8xf32, #tpu.memory_space<vmem>>, vector<1x8xf32>,
    %23 = vector.extract_strided_slice %9 {offsets = [2, 0], sizes = [1, 8], strides = [1, 1]} : vector<3x8xf32> to vector<1x8xf32>
    %c2 = arith.constant 2 : index
    %c0_12 = arith.constant 0 : index
    %24 = vector.load %arg5[%c2, %c0_12] : memref<3x8xf32, #tpu.memory_space<vmem>>, vector<1x8xf32>
    tpu.vector_store %arg5[%c2, %c0_12], %23 {strides = array<i32>} : memref<3x8xf32, #tpu.memory_space<vmem>>, vector<1x8xf32>,
    return
  }
  func.func @transform_0(%arg0: i32) -> (i32, i32) {
    %c0_i32 = arith.constant 0 : i32
    %c0_i32_0 = arith.constant 0 : i32
    return %c0_i32, %arg0 : i32, i32
  }
  func.func @transform_1(%arg0: i32) -> (i32, i32) {
    %c0_i32 = arith.constant 0 : i32
    %c0_i32_0 = arith.constant 0 : i32
    %c0_i32_1 = arith.constant 0 : i32
    return %c0_i32, %c0_i32_0 : i32, i32
  }
  func.func @transform_2(%arg0: i32) -> (i32, i32) {
    %c0_i32 = arith.constant 0 : i32
    %c0_i32_0 = arith.constant 0 : i32
    %c0_i32_1 = arith.constant 0 : i32
    return %c0_i32, %c0_i32_0 : i32, i32
  }
  func.func @transform_3(%arg0: i32) -> (i32, i32) {
    %c0_i32 = arith.constant 0 : i32
    %c0_i32_0 = arith.constant 0 : i32
    %c0_i32_1 = arith.constant 0 : i32
    return %c0_i32, %c0_i32_0 : i32, i32
  }
  func.func @transform_4(%arg0: i32) -> (i32, i32) {
    %c0_i32 = arith.constant 0 : i32
    %c0_i32_0 = arith.constant 0 : i32
    return %c0_i32, %arg0 : i32, i32
  }
}

</mosaic_0001>

<llo_original>
// kernel: tpu_custom_call.1
$region0: #{tpu_custom_call.1}
  #allocation0 [shape = 'u32[]', space=smem, size = 0x4, offset = 0x4, fixed_abs, tag = 'smem constant byte address 0x4 - core index']
  #allocation1 [shape = 'u32[72,128]{1,0:T(1,128)}', space=vmem, size = 0x9000, scoped, tag = 'internal scratch']
  %s0 = inlined_call_operand.vmem [shape: f32[8,8], index: 0, kind: input, shape index: {}]
  %s1 = inlined_call_operand.vmem [shape: f32[128,8], index: 1, kind: input, shape index: {}]
  %s2 = inlined_call_operand.vmem [shape: f32[3,128], index: 2, kind: input, shape index: {}]
  %s3 = inlined_call_operand.vmem [shape: f32[3,1], index: 3, kind: input, shape index: {}]
  %s4 = inlined_call_operand.hbm [shape: f32[3,8], index: 4, kind: output, shape index: {}]
  %s5 = sld [smem:[#allocation0]]
  $region26: #{tpu_custom_call.1} parent=0
    _
  %s7 = ssub.s32 1, %s5
  %s8 = scalar_select 0, %s7, %s5
  $region1: #{tpu_custom_call.1} parent=0
    #allocation2 [shape = 'u8[2048]{0}', space=vmem, size = 0x800, scoped, tag = 'output window, operand 0, single buffered']
    #allocation3 [shape = 's32[1]{0}', space=sflag, size = 0x4, scoped, tag = 'scoped memory for tpu_custom_call.1']
    %9 = vsyncpa [#allocation3], 0
    // Predicated region
    $region2: #{tpu_custom_call.1} parent=1 // pred_check
      _
    $region3: #{tpu_custom_call.1} parent=1 // pred_check_branch
      %11 = sbr.rel (0) target = $region5
    $region4: #{tpu_custom_call.1} parent=1 // pred_region
      _
    $region5: #{tpu_custom_call.1} parent=1 // pred_fallthru
      _
    // Predicated region
    $region6: #{tpu_custom_call.1} parent=1 // pred_check
      _
    $region7: #{tpu_custom_call.1} parent=1 // pred_check_branch
      %13 = sbr.rel (0) target = $region9
    $region8: #{tpu_custom_call.1} parent=1 // pred_region
      _
    $region9: #{tpu_custom_call.1} parent=1 // pred_fallthru
      _
    // Predicated region
    $region10: #{tpu_custom_call.1} parent=1 // pred_check
      _
    $region11: #{tpu_custom_call.1} parent=1 // pred_check_branch
      %15 = sbr.rel (0) target = $region13
    $region12: #{tpu_custom_call.1} parent=1 // pred_region
      _
    $region13: #{tpu_custom_call.1} parent=1 // pred_fallthru
      _
    // Predicated region
    $region14: #{tpu_custom_call.1} parent=1 // pred_check
      _
    $region15: #{tpu_custom_call.1} parent=1 // pred_check_branch
      %17 = sbr.rel (0) target = $region17
    $region16: #{tpu_custom_call.1} parent=1 // pred_region
      _
    $region17: #{tpu_custom_call.1} parent=1 // pred_fallthru
      _
    %v18 = vld [vmem:[%s0] sm:$0xff]
    %v19 = vld [vmem:[%s1] sm:$0xff]
    %v20 = vld [vmem:[%s1 + $0x8] sm:$0xff]
    %v21 = vld [vmem:[%s1 + $0x10] sm:$0xff]
    %v22 = vld [vmem:[%s1 + $0x18] sm:$0xff]
    %v23 = vld [vmem:[%s1 + $0x20] sm:$0xff]
    %v24 = vld [vmem:[%s1 + $0x28] sm:$0xff]
    %v25 = vld [vmem:[%s1 + $0x30] sm:$0xff]
    %v26 = vld [vmem:[%s1 + $0x38] sm:$0xff]
    %v27 = vld [vmem:[%s1 + $0x40] sm:$0xff]
    %v28 = vld [vmem:[%s1 + $0x48] sm:$0xff]
    %v29 = vld [vmem:[%s1 + $0x50] sm:$0xff]
    %v30 = vld [vmem:[%s1 + $0x58] sm:$0xff]
    %v31 = vld [vmem:[%s1 + $0x60] sm:$0xff]
    %v32 = vld [vmem:[%s1 + $0x68] sm:$0xff]
    %v33 = vld [vmem:[%s1 + $0x70] sm:$0xff]
    %v34 = vld [vmem:[%s1 + $0x78] sm:$0xff]
    %vm35 = vcmask 64512
    %v37 = vsel %vm35, %v19, 0
    %v40 = vsel %vm35, %v20, 0
    %v43 = vsel %vm35, %v21, 0
    %v46 = vsel %vm35, %v22, 0
    %v49 = vsel %vm35, %v23, 0
    %v52 = vsel %vm35, %v24, 0
    %v55 = vsel %vm35, %v25, 0
    %v58 = vsel %vm35, %v26, 0
    %v61 = vsel %vm35, %v27, 0
    %v64 = vsel %vm35, %v28, 0
    %v67 = vsel %vm35, %v29, 0
    %v70 = vsel %vm35, %v30, 0
    %v73 = vsel %vm35, %v31, 0
    %v76 = vsel %vm35, %v32, 0
    %v79 = vsel %vm35, %v33, 0
    %v82 = vsel %vm35, %v34, 0
    %84 = vmatpush.msra.mxu0 0.0
    %85 = vmatpush.msra.mxu0 0.0
    %86 = vmatpush.msra.mxu0 0.0
    %87 = vmatpush.msra.mxu0 0.0
    %88 = vmatpush.msra.mxu0 0.0
    %89 = vmatpush.msra.mxu0 0.0
    %90 = vmatpush.msra.mxu0 0.0
    %91 = vmatpush.msra.mxu0 0.0
    %92 = vmatpush.msra.mxu0 0.0
    %93 = vmatpush.msra.mxu0 0.0
    %94 = vmatpush.msra.mxu0 0.0
    %95 = vmatpush.msra.mxu0 0.0
    %96 = vmatpush.msra.mxu0 0.0
    %97 = vmatpush.msra.mxu0 0.0
    %98 = vmatpush.msra.mxu0 0.0
    %99 = vmatpush.msra.mxu0 %v18
    %100 = vmatmul.f32.gmra.mxu0 %v37
    %v101 = vpop.f32.mrf.mxu0
    %v102 = vadd.f32 0.0, %v101
    %103 = vmatmul.f32.gmra.mxu0 %v40
    %v104 = vpop.f32.mrf.mxu0
    %v105 = vadd.f32 0.0, %v104
    %106 = vmatmul.f32.gmra.mxu0 %v43
    %v107 = vpop.f32.mrf.mxu0
    %v108 = vadd.f32 0.0, %v107
    %109 = vmatmul.f32.gmra.mxu0 %v46
    %v110 = vpop.f32.mrf.mxu0
    %v111 = vadd.f32 0.0, %v110
    %112 = vmatmul.f32.gmra.mxu0 %v49
    %v113 = vpop.f32.mrf.mxu0
    %v114 = vadd.f32 0.0, %v113
    %115 = vmatmul.f32.gmra.mxu0 %v52
    %v116 = vpop.f32.mrf.mxu0
    %v117 = vadd.f32 0.0, %v116
    %118 = vmatmul.f32.gmra.mxu0 %v55
    %v119 = vpop.f32.mrf.mxu0
    %v120 = vadd.f32 0.0, %v119
    %121 = vmatmul.f32.gmra.mxu0 %v58
    %v122 = vpop.f32.mrf.mxu0
    %v123 = vadd.f32 0.0, %v122
    %124 = vmatmul.f32.gmra.mxu0 %v61
    %v125 = vpop.f32.mrf.mxu0
    %v126 = vadd.f32 0.0, %v125
    %127 = vmatmul.f32.gmra.mxu0 %v64
    %v128 = vpop.f32.mrf.mxu0
    %v129 = vadd.f32 0.0, %v128
    %130 = vmatmul.f32.gmra.mxu0 %v67
    %v131 = vpop.f32.mrf.mxu0
    %v132 = vadd.f32 0.0, %v131
    %133 = vmatmul.f32.gmra.mxu0 %v70
    %v134 = vpop.f32.mrf.mxu0
    %v135 = vadd.f32 0.0, %v134
    %136 = vmatmul.f32.gmra.mxu0 %v73
    %v137 = vpop.f32.mrf.mxu0
    %v138 = vadd.f32 0.0, %v137
    %139 = vmatmul.f32.gmra.mxu0 %v76
    %v140 = vpop.f32.mrf.mxu0
    %v141 = vadd.f32 0.0, %v140
    %142 = vmatmul.f32.gmra.mxu0 %v79
    %v143 = vpop.f32.mrf.mxu0
    %v144 = vadd.f32 0.0, %v143
    %145 = vmatmul.f32.gmra.mxu0 %v82
    %v146 = vpop.f32.mrf.mxu0
    %v147 = vadd.f32 0.0, %v146
    %148 = vdwg.mxu0
    %v149 = vmax.f32 %v102, 0.0
    %v150 = vmax.f32 %v105, 0.0
    %v151 = vmax.f32 %v108, 0.0
    %v152 = vmax.f32 %v111, 0.0
    %v153 = vmax.f32 %v114, 0.0
    %v154 = vmax.f32 %v117, 0.0
    %v155 = vmax.f32 %v120, 0.0
    %v156 = vmax.f32 %v123, 0.0
    %v157 = vmax.f32 %v126, 0.0
    %v158 = vmax.f32 %v129, 0.0
    %v159 = vmax.f32 %v132, 0.0
    %v160 = vmax.f32 %v135, 0.0
    %v161 = vmax.f32 %v138, 0.0
    %v162 = vmax.f32 %v141, 0.0
    %v163 = vmax.f32 %v144, 0.0
    %v164 = vmax.f32 %v147, 0.0
    %v165 = vld [vmem:[%s2] sm:$0x7]
    %v166 = vld [vmem:[%s3] sm:$0x7]
    %168 = vset.pattern.permute.xlu0 0
    %169 = vperm.xlu0 %168, %v166
    %v170 = vpop.permute.xlu0 %169
    %172 = vmatpush.msra.mxu0 %v164
    %173 = vmatpush.msra.mxu0 %v163
    %174 = vmatpush.msra.mxu0 %v162
    %175 = vmatpush.msra.mxu0 %v161
    %176 = vmatpush.msra.mxu0 %v160
    %177 = vmatpush.msra.mxu0 %v159
    %178 = vmatpush.msra.mxu0 %v158
    %179 = vmatpush.msra.mxu0 %v157
    %180 = vmatpush.msra.mxu0 %v156
    %181 = vmatpush.msra.mxu0 %v155
    %182 = vmatpush.msra.mxu0 %v154
    %183 = vmatpush.msra.mxu0 %v153
    %184 = vmatpush.msra.mxu0 %v152
    %185 = vmatpush.msra.mxu0 %v151
    %186 = vmatpush.msra.mxu0 %v150
    %187 = vmatpush.msra.mxu0 %v149
    %188 = vmatmul.f32.gmra.mxu0 %v165
    %v189 = vpop.f32.mrf.mxu0
    %v190 = vadd.f32 %v170, %v189
    %191 = vdwg.mxu0
    %v193 = vrot.slane %v190, 1
    %v195 = vmax.f32 %v190, %v193
    %v196 = vsub.f32 %v190, %v195
    %v197 = vmul.f32 %v196, 1.442695
    %v198 = vpow.pop %v197
    %v200 = vrot.slane %v195, 7
    %v202 = vsub.f32 %v190, %v200
    %v203 = vmul.f32 %v202, 1.442695
    %v204 = vpow.pop %v203
    %v206 = vrot.slane %v204, 1
    %v208 = vadd.f32 %v198, %v206
    %v209 = vrcp.pop %v208
    %v210 = vmul.f32 %v208, %v209
    %v211 = vsub.f32 1.0, %v210
    %v212 = vmul.f32 %v209, %v211
    %v213 = vadd.f32 %v209, %v212
    %vm214 = vweird.f32 %v208
    %vm215 = vweird.f32 %v209
    %vm216 = vmor %vm214, %vm215
    %v217 = vsel %vm216, %v209, %v213
    %v218 = vand.u32 2147483647, %v208
    %vm219 = vcmp.eq.f32.partialorder %v218, 8.507059e+37
    %v220 = vand.u32 %v208, 2147483648
    %v221 = vor.u32 1.1754944e-38, %v220
    %v222 = vsel %vm219, %v221, %v217
    %v223 = vmul.f32 %v198, %v222
    %vm224 = vcmask 57344
    %225 = vst.msk [vmem:[#allocation2] sm:$0x1] %vm224, %v223
    %v227 = vrot.slane %v222, 7
    %v229 = vmul.f32 %v204, %v227
    %vm230 = vcmask 58369
    %231 = vst.msk [vmem:[#allocation2] sm:$0x2] %vm230, %v229
    %vm232 = vcmask 59394
    %233 = vst.msk [vmem:[#allocation2] sm:$0x4] %vm232, %v190
    // Predicated region
    $region18: #{tpu_custom_call.1} parent=1 // pred_check
      _
    $region19: #{tpu_custom_call.1} parent=1 // pred_check_branch
      %235 = sbr.rel (0) target = $region21
    $region20: #{tpu_custom_call.1} parent=1 // pred_region
      %237 = vsyncadd [#allocation3], 0
      %s239 = sshll.u32 [#allocation2], 4
      %s240 = int_to_ptr.vmem [resolvable:$true] %s239
      %s241 = sshll.u32 %s4, 4
      %s242 = int_to_ptr.hbm [resolvable:$true] %s241
      %244 = dma.vmem_to_hbm [thread:$0]  %s240, 64, %s242, [#allocation3]
    $region21: #{tpu_custom_call.1} parent=1 // pred_fallthru
      _
    // Predicated region
    $region22: #{tpu_custom_call.1} parent=1 // pred_check
      _
    $region23: #{tpu_custom_call.1} parent=1 // pred_check_branch
      %246 = sbr.rel (0) target = $region25
    $region24: #{tpu_custom_call.1} parent=1 // pred_region
      %248 = dma.done [#allocation3], 64
    $region25: #{tpu_custom_call.1} parent=1 // pred_fallthru
      _
    %249 = vsyncpa [#allocation3], 1

</llo_original>
